<compile_context>
chip_gen: v6e
topology: v6e:2x2x1
jax: 0.10.0
libtpu: 0.0.40
codegen_flags: <defaults>
</compile_context>

<pallas_src>
import jax
import jax.numpy as jnp
from jax.experimental import pallas as pl
from jax.experimental.pallas import tpu as pltpu


def value_network_kernel(x_ref, w1_ref, b1_ref, w2_ref, b2_ref, w3_ref, b3_ref, o_ref):
    # layer1: Linear(D_in -> H1) + ReLU.  Kept on the MXU even though K=D_in is
    # tiny (layer 1 is ~3% of total FLOPs).  If D_in ever grows, pre-pad w1's K
    # to a multiple of the MXU width in the stored layout rather than per call.
    x = x_ref[...].astype(jnp.bfloat16)
    h1 = jnp.dot(x, w1_ref[...], preferred_element_type=jnp.float32)
    h1 = jnp.maximum(h1 + b1_ref[...], 0.0)

    # layer2: Linear(H1 -> H2) + ReLU (bf16 matmul, f32 accumulate).
    h2 = jnp.dot(h1.astype(jnp.bfloat16), w2_ref[...], preferred_element_type=jnp.float32)
    h2 = jnp.maximum(h2 + b2_ref[...], 0.0)

    # state_value: Linear(H2 -> 1) as a VPU multiply + lane reduction (avoids an
    # N=1 MXU matmul).  Store lane-dense as a (1, tile) row so the output
    # writeback is an unmasked dense store; the (tile,) -> (1, tile) relayout is
    # a cheap XLU move with plenty of slot slack.  b3 is a true scalar in SMEM.
    v = jnp.sum(h2 * w3_ref[...], axis=-1)            # (tile,)
    o_ref[...] = v.reshape(1, -1) + b3_ref[0, 0]       # (1, tile)


def _round_up(n, m):
    return ((n + m - 1) // m) * m


def value_network_forward(state, params, *, tm=512):
    """Forward pass of ValueNetwork as a fused, batch-tiled Pallas kernel.

    state: (B, D_in) float32
    params: dict with
        w1 (D_in, H1) bf16, b1 (1, H1) f32,
        w2 (H1, H2)  bf16, b2 (1, H2) f32,
        w3 (1, H2)   f32,  b3 (1, 1)  f32
    tm: maximum batch-tile (rows per grid step).  The kernel is bound by
        per-grid-step overhead for large batches, so bigger tiles are better.
    returns: (B, 1) float32
    """
    B, d_in = state.shape
    w1, b1 = params["w1"], params["b1"]
    w2, b2 = params["w2"], params["b2"]
    w3, b3 = params["w3"], params["b3"]
    h1 = w1.shape[1]
    h2 = w2.shape[1]

    # Batch tile selection:
    #   B <= 8    -> single full-array block, no padding, no output slice
    #                (full-dim blocks are exempt from the (8,128) rule).
    #   otherwise -> multiple of 8 (sublane alignment), capped at tm, and small
    #                enough that the grid has >= 2 steps so ("parallel",) can
    #                split the batch across v7x's two TensorCores.
    if B <= 8:
        tile = B
    else:
        tile = min(tm, _round_up((B + 1) // 2, 8))
    b_pad = _round_up(B, tile)
    if b_pad != B:
        # Padded rows push relu(b1) garbage through the net; harmless, sliced off.
        state = jnp.pad(state, ((0, b_pad - B), (0, 0)))
    grid_n = b_pad // tile

    out = pl.pallas_call(
        value_network_kernel,
        # Lane-dense output: one (1, tile) row per grid step.
        out_shape=jax.ShapeDtypeStruct((grid_n, tile), jnp.float32),
        grid=(grid_n,),
        in_specs=[
            # x tile streams over the batch grid axis.
            pl.BlockSpec((tile, d_in), lambda i: (i, 0)),
            # Weights / biases: constant index_map -> stay VMEM-resident while
            # the batch streams (double-buffered x / out tiles only).
            pl.BlockSpec((d_in, h1), lambda i: (0, 0)),
            pl.BlockSpec((1, h1), lambda i: (0, 0)),
            pl.BlockSpec((h1, h2), lambda i: (0, 0)),
            pl.BlockSpec((1, h2), lambda i: (0, 0)),
            pl.BlockSpec((1, h2), lambda i: (0, 0)),
            # Final bias is a true scalar: SMEM, instead of burning a full
            # (8,128) VMEM tile + its own DMA on a (1,1) value.
            pl.BlockSpec(memory_space=pltpu.MemorySpace.SMEM),
        ],
        out_specs=pl.BlockSpec((1, tile), lambda i: (i, 0)),
        compiler_params=pltpu.CompilerParams(
            dimension_semantics=("parallel",),
        ),
    )(state, w1, b1, w2, b2, w3, b3)

    out = out.reshape(b_pad, 1)
    if b_pad != B:
        out = out[:B]
    return out


def init_params(key, input_dims, layer1_size=256, layer2_size=256):
    """Deterministic init matching nn.Linear's U(-1/sqrt(fan_in), +1/sqrt(fan_in)).

    Matmul weights (w1, w2) are stored in bfloat16 (quantized vs the fp32
    PyTorch module); biases and the final reduce vector stay float32.
    """
    d_in = input_dims[0]
    k1, k2, k3, k4, k5, k6 = jax.random.split(key, 6)

    def unif(k, shape, fan_in):
        bound = 1.0 / jnp.sqrt(jnp.float32(fan_in))
        return jax.random.uniform(k, shape, jnp.float32, -bound, bound)

    return {
        "w1": unif(k1, (d_in, layer1_size), d_in).astype(jnp.bfloat16),
        "b1": unif(k2, (1, layer1_size), d_in),
        "w2": unif(k3, (layer1_size, layer2_size), layer1_size).astype(jnp.bfloat16),
        "b2": unif(k4, (1, layer2_size), layer1_size),
        # w3 stored as (1, H2): final layer is a multiply + lane reduce.
        "w3": unif(k5, (1, layer2_size), layer2_size),
        "b3": unif(k6, (1, 1), layer2_size),
    }


if __name__ == "__main__":
    key = jax.random.PRNGKey(0)
    k_x1, k_x2, k_p = jax.random.split(key, 3)

    input_dims = (8,)          # state feature dimension
    layer1_size = 256
    layer2_size = 256
    params = init_params(k_p, input_dims, layer1_size, layer2_size)

    def reference(x, *, full_precision):
        """Plain-JAX reference; full_precision=True mimics the fp32 PyTorch module."""
        w1 = params["w1"].astype(jnp.float32) if full_precision else params["w1"]
        w2 = params["w2"].astype(jnp.float32) if full_precision else params["w2"]
        xin = x if full_precision else x.astype(jnp.bfloat16)
        r1 = jnp.maximum(
            jnp.dot(xin, w1, preferred_element_type=jnp.float32) + params["b1"], 0.0)
        r1 = r1 if full_precision else r1.astype(jnp.bfloat16)
        r2 = jnp.maximum(
            jnp.dot(r1, w2, preferred_element_type=jnp.float32) + params["b2"], 0.0)
        return jnp.sum(r2 * params["w3"], axis=-1, keepdims=True) + params["b3"]

    # Small batch (SAC acting path): no padding, single full-array block.
    state_small = jax.random.normal(k_x1, (2, input_dims[0]), dtype=jnp.float32)
    v_small = value_network_forward(state_small, params)
    jax.block_until_ready(v_small)
    assert v_small.shape == (2, 1)
    assert jnp.allclose(v_small, reference(state_small, full_precision=False),
                        atol=1e-3, rtol=1e-3)
    # Quantified bf16-weight gap vs the fp32 PyTorch module (loose tolerance).
    assert jnp.allclose(v_small, reference(state_small, full_precision=True),
                        atol=5e-2, rtol=5e-2)

    # Larger batch: exercises the tiled / padded / multi-grid-step path.
    state_big = jax.random.normal(k_x2, (300, input_dims[0]), dtype=jnp.float32)
    v_big = value_network_forward(state_big, params)
    jax.block_until_ready(v_big)
    assert v_big.shape == (300, 1)
    assert jnp.allclose(v_big, reference(state_big, full_precision=False),
                        atol=1e-3, rtol=1e-3)

    # TODO(synk): optimizer (Adam) / save_checkpoint / load_checkpoint are host-side
    # training utilities with no kernel equivalent; only forward() is implemented.

    print("KERNEL_OK")
</pallas_src>

<mosaic_0001>
module attributes {stable_mosaic.version = 11 : i64} {
  func.func @value_network_kernel(%arg0: i32, %arg1: memref<2x8xf32, #tpu.memory_space<vmem>>, %arg2: memref<8x256xbf16, #tpu.memory_space<vmem>>, %arg3: memref<1x256xf32, #tpu.memory_space<vmem>>, %arg4: memref<256x256xbf16, #tpu.memory_space<vmem>>, %arg5: memref<1x256xf32, #tpu.memory_space<vmem>>, %arg6: memref<1x256xf32, #tpu.memory_space<vmem>>, %arg7: memref<1x1xf32, #tpu.memory_space<smem>>, %arg8: memref<1x2xf32, #tpu.memory_space<vmem>>) attributes {dimension_semantics = [#tpu.dimension_semantics<parallel>], iteration_bounds = array<i64: 1>, scalar_prefetch = 0 : i64, scratch_operands = 0 : i64, tpu.core_type = #tpu.core_type<tc>, window_params = [{transform_indices = @transform_0, window_bounds = array<i64: 2, 8>}, {pipeline_mode = #tpu.pipeline_mode<synchronous>, transform_indices = @transform_1, window_bounds = array<i64: 8, 256>}, {pipeline_mode = #tpu.pipeline_mode<synchronous>, transform_indices = @transform_2, window_bounds = array<i64: 1, 256>}, {pipeline_mode = #tpu.pipeline_mode<synchronous>, transform_indices = @transform_3, window_bounds = array<i64: 256, 256>}, {pipeline_mode = #tpu.pipeline_mode<synchronous>, transform_indices = @transform_4, window_bounds = array<i64: 1, 256>}, {pipeline_mode = #tpu.pipeline_mode<synchronous>, transform_indices = @transform_5, window_bounds = array<i64: 1, 256>}, {transform_indices = @transform_6, window_bounds = array<i64: 1, 1>}, {transform_indices = @transform_7, window_bounds = array<i64: 1, 2>}]} {
    %c0 = arith.constant 0 : index
    %c0_0 = arith.constant 0 : index
    %0 = vector.load %arg1[%c0, %c0_0] : memref<2x8xf32, #tpu.memory_space<vmem>>, vector<2x8xf32>
    %1 = arith.truncf %0 : vector<2x8xf32> to vector<2x8xbf16>
    %c0_1 = arith.constant 0 : index
    %c0_2 = arith.constant 0 : index
    %2 = vector.load %arg2[%c0_1, %c0_2] : memref<8x256xbf16, #tpu.memory_space<vmem>>, vector<8x256xbf16>
    %cst = arith.constant dense<0.000000e+00> : vector<2x256xf32>
    %3 = tpu.matmul %1, %2, %cst {dimension_numbers = #tpu.dot_dimension_numbers<[1], [0], [0], [1], [0, 0, 1, 1], [], []>} : vector<2x8xbf16>, vector<8x256xbf16>, vector<2x256xf32> -> vector<2x256xf32>
    %c0_3 = arith.constant 0 : index
    %c0_4 = arith.constant 0 : index
    %4 = vector.load %arg3[%c0_3, %c0_4] : memref<1x256xf32, #tpu.memory_space<vmem>>, vector<1x256xf32>
    %5 = vector.broadcast %4 : vector<1x256xf32> to vector<2x256xf32>
    %6 = arith.addf %3, %5 : vector<2x256xf32>
    %cst_5 = arith.constant 0.000000e+00 : f32
    %7 = vector.broadcast %cst_5 : f32 to vector<2x256xf32>
    %8 = arith.maximumf %6, %7 : vector<2x256xf32>
    %9 = arith.truncf %8 : vector<2x256xf32> to vector<2x256xbf16>
    %c0_6 = arith.constant 0 : index
    %c0_7 = arith.constant 0 : index
    %10 = vector.load %arg4[%c0_6, %c0_7] : memref<256x256xbf16, #tpu.memory_space<vmem>>, vector<256x256xbf16>
    %cst_8 = arith.constant dense<0.000000e+00> : vector<2x256xf32>
    %11 = tpu.matmul %9, %10, %cst_8 {dimension_numbers = #tpu.dot_dimension_numbers<[1], [0], [0], [1], [0, 0, 1, 1], [], []>} : vector<2x256xbf16>, vector<256x256xbf16>, vector<2x256xf32> -> vector<2x256xf32>
    %c0_9 = arith.constant 0 : index
    %c0_10 = arith.constant 0 : index
    %12 = vector.load %arg5[%c0_9, %c0_10] : memref<1x256xf32, #tpu.memory_space<vmem>>, vector<1x256xf32>
    %13 = vector.broadcast %12 : vector<1x256xf32> to vector<2x256xf32>
    %14 = arith.addf %11, %13 : vector<2x256xf32>
    %cst_11 = arith.constant 0.000000e+00 : f32
    %15 = vector.broadcast %cst_11 : f32 to vector<2x256xf32>
    %16 = arith.maximumf %14, %15 : vector<2x256xf32>
    %c0_12 = arith.constant 0 : index
    %c0_13 = arith.constant 0 : index
    %17 = vector.load %arg6[%c0_12, %c0_13] : memref<1x256xf32, #tpu.memory_space<vmem>>, vector<1x256xf32>
    %18 = vector.broadcast %17 : vector<1x256xf32> to vector<2x256xf32>
    %19 = arith.mulf %16, %18 : vector<2x256xf32>
    %cst_14 = arith.constant dense<0.000000e+00> : vector<2xf32>
    %20 = vector.multi_reduction <add>, %19, %cst_14 [1] : vector<2x256xf32> to vector<2xf32>
    %21 = vector.shape_cast %20 : vector<2xf32> to vector<1x2xf32>
    %c0_15 = arith.constant 0 : index
    %c0_16 = arith.constant 0 : index
    %22 = memref.load %arg7[%c0_15, %c0_16] : memref<1x1xf32, #tpu.memory_space<smem>>
    %23 = vector.broadcast %22 : f32 to vector<1x2xf32>
    %24 = arith.addf %21, %23 : vector<1x2xf32>
    %c0_17 = arith.constant 0 : index
    %c0_18 = arith.constant 0 : index
    %25 = vector.load %arg8[%c0_17, %c0_18] : memref<1x2xf32, #tpu.memory_space<vmem>>, vector<1x2xf32>
    tpu.vector_store %arg8[%c0_17, %c0_18], %24 {strides = array<i32>} : memref<1x2xf32, #tpu.memory_space<vmem>>, vector<1x2xf32>,
    return
  }
  func.func @transform_0(%arg0: i32) -> (i32, i32) {
    %c0_i32 = arith.constant 0 : i32
    %c0_i32_0 = arith.constant 0 : i32
    return %arg0, %c0_i32 : i32, i32
  }
  func.func @transform_1(%arg0: i32) -> (i32, i32) {
    %c0_i32 = arith.constant 0 : i32
    %c0_i32_0 = arith.constant 0 : i32
    %c0_i32_1 = arith.constant 0 : i32
    return %c0_i32, %c0_i32_0 : i32, i32
  }
  func.func @transform_2(%arg0: i32) -> (i32, i32) {
    %c0_i32 = arith.constant 0 : i32
    %c0_i32_0 = arith.constant 0 : i32
    %c0_i32_1 = arith.constant 0 : i32
    return %c0_i32, %c0_i32_0 : i32, i32
  }
  func.func @transform_3(%arg0: i32) -> (i32, i32) {
    %c0_i32 = arith.constant 0 : i32
    %c0_i32_0 = arith.constant 0 : i32
    %c0_i32_1 = arith.constant 0 : i32
    return %c0_i32, %c0_i32_0 : i32, i32
  }
  func.func @transform_4(%arg0: i32) -> (i32, i32) {
    %c0_i32 = arith.constant 0 : i32
    %c0_i32_0 = arith.constant 0 : i32
    %c0_i32_1 = arith.constant 0 : i32
    return %c0_i32, %c0_i32_0 : i32, i32
  }
  func.func @transform_5(%arg0: i32) -> (i32, i32) {
    %c0_i32 = arith.constant 0 : i32
    %c0_i32_0 = arith.constant 0 : i32
    %c0_i32_1 = arith.constant 0 : i32
    return %c0_i32, %c0_i32_0 : i32, i32
  }
  func.func @transform_6(%arg0: i32) -> (i32, i32) {
    %c0_i32 = arith.constant 0 : i32
    %c0_i32_0 = arith.constant 0 : i32
    %c0_i32_1 = arith.constant 0 : i32
    return %c0_i32, %c0_i32_0 : i32, i32
  }
  func.func @transform_7(%arg0: i32) -> (i32, i32) {
    %c0_i32 = arith.constant 0 : i32
    %c0_i32_0 = arith.constant 0 : i32
    return %arg0, %c0_i32 : i32, i32
  }
}

</mosaic_0001>

<llo_original>
// kernel: tpu_custom_call.1
$region0: #{tpu_custom_call.1}
  #allocation0 [shape = 'u32[]', space=smem, size = 0x4, offset = 0x4, fixed_abs, tag = 'smem constant byte address 0x4 - core index']
  #allocation1 [shape = 'u32[144,128]{1,0:T(1,128)}', space=vmem, size = 0x12000, scoped, tag = 'internal scratch']
  #allocation2 [shape = 'f32[1,1]{1,0:T(1,128)S(6)}', space=smem, size = 0x200, scoped, tag = 'scoped memory for tpu_custom_call.1']
  %s0 = inlined_call_operand.vmem [shape: f32[2,8], index: 0, kind: input, shape index: {}]
  %s1 = inlined_call_operand.hbm [shape: bf16[8,256], index: 1, kind: input, shape index: {}]
  %s2 = inlined_call_operand.vmem [shape: f32[1,256], index: 2, kind: input, shape index: {}]
  %s3 = inlined_call_operand.hbm [shape: bf16[256,256], index: 3, kind: input, shape index: {}]
  %s4 = inlined_call_operand.vmem [shape: f32[1,256], index: 4, kind: input, shape index: {}]
  %s5 = inlined_call_operand.vmem [shape: f32[1,256], index: 5, kind: input, shape index: {}]
  %s6 = inlined_call_operand.<no memory space> [shape: f32[1,1], index: 6, kind: input, shape index: {}]
  %s7 = inlined_call_operand.hbm [shape: f32[1,2], index: 7, kind: output, shape index: {}]
  %s8 = sld [smem:[#allocation0]]
  $region46: #{tpu_custom_call.1} parent=0
    _
  %s10 = ssub.s32 1, %s8
  %s11 = scalar_select 0, %s10, %s8
  %12 = sst [smem:[#allocation2]] %s6
  $region1: #{tpu_custom_call.1} parent=0
    #allocation3 [shape = 'u8[4096]{0}', space=vmem, size = 0x1000, scoped, tag = 'input window, operand 1, single buffered']
    #allocation4 [shape = 's32[1]{0}', space=sflag, size = 0x4, scoped, tag = 'scoped memory for tpu_custom_call.1']
    #allocation5 [shape = 's32[1]{0}', space=sflag, size = 0x4, scoped, tag = 'scoped memory for tpu_custom_call.1']
    #allocation6 [shape = 'u8[131072]{0}', space=vmem, size = 0x20000, scoped, tag = 'input window, operand 3, single buffered']
    #allocation7 [shape = 's32[1]{0}', space=sflag, size = 0x4, scoped, tag = 'scoped memory for tpu_custom_call.1']
    #allocation8 [shape = 'u8[512]{0}', space=vmem, size = 0x400, scoped, tag = 'output window, operand 0, single buffered']
    %13 = vsyncpa [#allocation4], 0
    %14 = vsyncpa [#allocation7], 0
    %15 = vsyncpa [#allocation5], 0
    // Predicated region
    $region2: #{tpu_custom_call.1} parent=1 // pred_check
      _
    $region3: #{tpu_custom_call.1} parent=1 // pred_check_branch
      %17 = sbr.rel (0) target = $region5
    $region4: #{tpu_custom_call.1} parent=1 // pred_region
      _
    $region5: #{tpu_custom_call.1} parent=1 // pred_fallthru
      _
    // Predicated region
    $region6: #{tpu_custom_call.1} parent=1 // pred_check
      _
    $region7: #{tpu_custom_call.1} parent=1 // pred_check_branch
      %19 = sbr.rel (0) target = $region9
    $region8: #{tpu_custom_call.1} parent=1 // pred_region
      %s21 = ssub.s32 128, 128
      %22 = vsyncadd [#allocation4], %s21
      %s24 = sshll.u32 [#allocation3], 4
      %s25 = int_to_ptr.vmem [resolvable:$true] %s24
      %27 = dma.hbm_to_vmem [thread:$0]  %s1, 128, %s25, [#allocation4]
    $region9: #{tpu_custom_call.1} parent=1 // pred_fallthru
      _
    // Predicated region
    $region10: #{tpu_custom_call.1} parent=1 // pred_check
      _
    $region11: #{tpu_custom_call.1} parent=1 // pred_check_branch
      %29 = sbr.rel (0) target = $region13
    $region12: #{tpu_custom_call.1} parent=1 // pred_region
      _
    $region13: #{tpu_custom_call.1} parent=1 // pred_fallthru
      _
    // Predicated region
    $region14: #{tpu_custom_call.1} parent=1 // pred_check
      _
    $region15: #{tpu_custom_call.1} parent=1 // pred_check_branch
      %31 = sbr.rel (0) target = $region17
    $region16: #{tpu_custom_call.1} parent=1 // pred_region
      %s33 = ssub.s32 4096, 4096
      %34 = vsyncadd [#allocation7], %s33
      %s35 = sshll.u32 [#allocation6], 4
      %s36 = int_to_ptr.vmem [resolvable:$true] %s35
      %41 = dma.hbm_to_vmem [thread:$0]  %s3, 4096, %s36, [#allocation7], 128, 128, 8
    $region17: #{tpu_custom_call.1} parent=1 // pred_fallthru
      _
    // Predicated region
    $region18: #{tpu_custom_call.1} parent=1 // pred_check
      _
    $region19: #{tpu_custom_call.1} parent=1 // pred_check_branch
      %43 = sbr.rel (0) target = $region21
    $region20: #{tpu_custom_call.1} parent=1 // pred_region
      _
    $region21: #{tpu_custom_call.1} parent=1 // pred_fallthru
      _
    // Predicated region
    $region22: #{tpu_custom_call.1} parent=1 // pred_check
      _
    $region23: #{tpu_custom_call.1} parent=1 // pred_check_branch
      %45 = sbr.rel (0) target = $region25
    $region24: #{tpu_custom_call.1} parent=1 // pred_region
      _
    $region25: #{tpu_custom_call.1} parent=1 // pred_fallthru
      _
    // Predicated region
    $region26: #{tpu_custom_call.1} parent=1 // pred_check
      _
    $region27: #{tpu_custom_call.1} parent=1 // pred_check_branch
      %47 = sbr.rel (0) target = $region29
    $region28: #{tpu_custom_call.1} parent=1 // pred_region
      _
    $region29: #{tpu_custom_call.1} parent=1 // pred_fallthru
      _
    // Predicated region
    $region30: #{tpu_custom_call.1} parent=1 // pred_check
      _
    $region31: #{tpu_custom_call.1} parent=1 // pred_check_branch
      %49 = sbr.rel (0) target = $region33
    $region32: #{tpu_custom_call.1} parent=1 // pred_region
      %50 = dma.done [#allocation4], 128
    $region33: #{tpu_custom_call.1} parent=1 // pred_fallthru
      _
    // Predicated region
    $region34: #{tpu_custom_call.1} parent=1 // pred_check
      _
    $region35: #{tpu_custom_call.1} parent=1 // pred_check_branch
      %52 = sbr.rel (0) target = $region37
    $region36: #{tpu_custom_call.1} parent=1 // pred_region
      %53 = dma.done [#allocation7], 4096
    $region37: #{tpu_custom_call.1} parent=1 // pred_fallthru
      _
    %v55 = vld [vmem:[%s0] sm:$0x3]
    %v56 = vpack.c.bf16 %v55, %v55
    %v57 = vld [vmem:[#allocation3] sm:$0xff]
    %v58 = vld [vmem:[%s2] sm:$0x3]
    %v60 = vlaneseq
    %v61 = vshrl.u32 %v60, 7
    %v62 = vsub.s32 0, %v61
    %v63 = vrot.slane %v58, %v62
    %v64 = vlaneseq
    %v65 = vshrl.u32 %v64, 7
    %v66 = vsub.s32 1, %v65
    %v67 = vrot.slane %v58, %v66
    %v71 = vunpack.c.l.b16 %v57
    %v72 = vunpack.c.h.b16 %v57
    %v73 = vpack.c.b16 %v71, %v71
    %v74 = vpack.c.b16 %v72, %v72
    %vm75 = vcmask 64512
    %v77 = vsel %vm75, %v56, 0
    %vm79 = vcmask 1043456
    %v81 = vsel %vm79, %v73, 0
    %v84 = vsel %vm79, %v74, 0
    %86 = vmatprep.subr.bf16.mxu0 0
    %87 = vmatpush1.bf16.msra.mxu0 0
    %88 = vmatprep.subr.bf16.mxu0 0
    %89 = vmatpush1.bf16.msra.mxu0 0
    %90 = vmatprep.subr.bf16.mxu0 0
    %91 = vmatpush1.bf16.msra.mxu0 0
    %92 = vmatprep.subr.bf16.mxu0 0
    %93 = vmatpush1.bf16.msra.mxu0 0
    %94 = vmatprep.subr.bf16.mxu0 0
    %95 = vmatpush1.bf16.msra.mxu0 0
    %96 = vmatprep.subr.bf16.mxu0 0
    %97 = vmatpush1.bf16.msra.mxu0 0
    %98 = vmatprep.subr.bf16.mxu0 0
    %99 = vmatpush1.bf16.msra.mxu0 0
    %100 = vmatprep.subr.bf16.mxu0 %v84
    %101 = vmatpush1.bf16.msra.mxu0 %v81
    %102 = vmatprep.subr.bf16.mxu0 0
    %103 = vmatpush2.bf16.msra.mxu0 0
    %104 = vmatprep.subr.bf16.mxu0 0
    %105 = vmatpush2.bf16.msra.mxu0 0
    %106 = vmatprep.subr.bf16.mxu0 0
    %107 = vmatpush2.bf16.msra.mxu0 0
    %108 = vmatprep.subr.bf16.mxu0 0
    %109 = vmatpush2.bf16.msra.mxu0 0
    %110 = vmatprep.subr.bf16.mxu0 0
    %111 = vmatpush2.bf16.msra.mxu0 0
    %112 = vmatprep.subr.bf16.mxu0 0
    %113 = vmatpush2.bf16.msra.mxu0 0
    %114 = vmatprep.subr.bf16.mxu0 0
    %115 = vmatpush2.bf16.msra.mxu0 0
    %116 = vmatprep.subr.bf16.mxu0 0
    %117 = vmatpush2.bf16.msra.mxu0 0
    %118 = vmatprep.mubr.bf16.mxu0 0
    %119 = vmatmul.mubr.bf16.gmra.mxu0 %v77
    %v120 = vpop.f32.mrf.mxu0
    %v121 = vadd.f32 %v63, %v120
    %v122 = vpop.f32.mrf.mxu0
    %v123 = vadd.f32 %v67, %v122
    %v124 = vpop.f32.mrf.mxu0
    %v125 = vpop.f32.mrf.mxu0
    %126 = vdwg.mxu0
    %v127 = vmax.f32 %v121, 0.0
    %v128 = vmax.f32 %v123, 0.0
    %v129 = vpack.c.bf16 %v127, %v127
    %v130 = vpack.c.bf16 %v128, %v128
    %v131 = vld [vmem:[#allocation6] sm:$0xff]
    %v132 = vld [vmem:[#allocation6 + $0x8] sm:$0xff]
    %v133 = vld [vmem:[#allocation6 + $0x10] sm:$0xff]
    %v134 = vld [vmem:[#allocation6 + $0x18] sm:$0xff]
    %v135 = vld [vmem:[#allocation6 + $0x20] sm:$0xff]
    %v136 = vld [vmem:[#allocation6 + $0x28] sm:$0xff]
    %v137 = vld [vmem:[#allocation6 + $0x30] sm:$0xff]
    %v138 = vld [vmem:[#allocation6 + $0x38] sm:$0xff]
    %v139 = vld [vmem:[#allocation6 + $0x40] sm:$0xff]
    %v140 = vld [vmem:[#allocation6 + $0x48] sm:$0xff]
    %v141 = vld [vmem:[#allocation6 + $0x50] sm:$0xff]
    %v142 = vld [vmem:[#allocation6 + $0x58] sm:$0xff]
    %v143 = vld [vmem:[#allocation6 + $0x60] sm:$0xff]
    %v144 = vld [vmem:[#allocation6 + $0x68] sm:$0xff]
    %v145 = vld [vmem:[#allocation6 + $0x70] sm:$0xff]
    %v146 = vld [vmem:[#allocation6 + $0x78] sm:$0xff]
    %v147 = vld [vmem:[#allocation6 + $0x80] sm:$0xff]
    %v148 = vld [vmem:[#allocation6 + $0x88] sm:$0xff]
    %v149 = vld [vmem:[#allocation6 + $0x90] sm:$0xff]
    %v150 = vld [vmem:[#allocation6 + $0x98] sm:$0xff]
    %v151 = vld [vmem:[#allocation6 + $0xa0] sm:$0xff]
    %v152 = vld [vmem:[#allocation6 + $0xa8] sm:$0xff]
    %v153 = vld [vmem:[#allocation6 + $0xb0] sm:$0xff]
    %v154 = vld [vmem:[#allocation6 + $0xb8] sm:$0xff]
    %v155 = vld [vmem:[#allocation6 + $0xc0] sm:$0xff]
    %v156 = vld [vmem:[#allocation6 + $0xc8] sm:$0xff]
    %v157 = vld [vmem:[#allocation6 + $0xd0] sm:$0xff]
    %v158 = vld [vmem:[#allocation6 + $0xd8] sm:$0xff]
    %v159 = vld [vmem:[#allocation6 + $0xe0] sm:$0xff]
    %v160 = vld [vmem:[#allocation6 + $0xe8] sm:$0xff]
    %v161 = vld [vmem:[#allocation6 + $0xf0] sm:$0xff]
    %v162 = vld [vmem:[#allocation6 + $0xf8] sm:$0xff]
    %v163 = vld [vmem:[%s4] sm:$0x3]
    %v165 = vlaneseq
    %v166 = vshrl.u32 %v165, 7
    %v167 = vsub.s32 0, %v166
    %v168 = vrot.slane %v163, %v167
    %v169 = vlaneseq
    %v170 = vshrl.u32 %v169, 7
    %v171 = vsub.s32 1, %v170
    %v172 = vrot.slane %v163, %v171
    %v207 = vunpack.c.l.b16 %v131
    %v208 = vunpack.c.h.b16 %v131
    %v209 = vunpack.c.l.b16 %v132
    %v210 = vunpack.c.h.b16 %v132
    %v211 = vunpack.c.l.b16 %v133
    %v212 = vunpack.c.h.b16 %v133
    %v213 = vunpack.c.l.b16 %v134
    %v214 = vunpack.c.h.b16 %v134
    %v215 = vunpack.c.l.b16 %v135
    %v216 = vunpack.c.h.b16 %v135
    %v217 = vunpack.c.l.b16 %v136
    %v218 = vunpack.c.h.b16 %v136
    %v219 = vunpack.c.l.b16 %v137
    %v220 = vunpack.c.h.b16 %v137
    %v221 = vunpack.c.l.b16 %v138
    %v222 = vunpack.c.h.b16 %v138
    %v223 = vunpack.c.l.b16 %v139
    %v224 = vunpack.c.h.b16 %v139
    %v225 = vunpack.c.l.b16 %v140
    %v226 = vunpack.c.h.b16 %v140
    %v227 = vunpack.c.l.b16 %v141
    %v228 = vunpack.c.h.b16 %v141
    %v229 = vunpack.c.l.b16 %v142
    %v230 = vunpack.c.h.b16 %v142
    %v231 = vunpack.c.l.b16 %v143
    %v232 = vunpack.c.h.b16 %v143
    %v233 = vunpack.c.l.b16 %v144
    %v234 = vunpack.c.h.b16 %v144
    %v235 = vunpack.c.l.b16 %v145
    %v236 = vunpack.c.h.b16 %v145
    %v237 = vunpack.c.l.b16 %v146
    %v238 = vunpack.c.h.b16 %v146
    %v239 = vunpack.c.l.b16 %v147
    %v240 = vunpack.c.h.b16 %v147
    %v241 = vunpack.c.l.b16 %v148
    %v242 = vunpack.c.h.b16 %v148
    %v243 = vunpack.c.l.b16 %v149
    %v244 = vunpack.c.h.b16 %v149
    %v245 = vunpack.c.l.b16 %v150
    %v246 = vunpack.c.h.b16 %v150
    %v247 = vunpack.c.l.b16 %v151
    %v248 = vunpack.c.h.b16 %v151
    %v249 = vunpack.c.l.b16 %v152
    %v250 = vunpack.c.h.b16 %v152
    %v251 = vunpack.c.l.b16 %v153
    %v252 = vunpack.c.h.b16 %v153
    %v253 = vunpack.c.l.b16 %v154
    %v254 = vunpack.c.h.b16 %v154
    %v255 = vunpack.c.l.b16 %v155
    %v256 = vunpack.c.h.b16 %v155
    %v257 = vunpack.c.l.b16 %v156
    %v258 = vunpack.c.h.b16 %v156
    %v259 = vunpack.c.l.b16 %v157
    %v260 = vunpack.c.h.b16 %v157
    %v261 = vunpack.c.l.b16 %v158
    %v262 = vunpack.c.h.b16 %v158
    %v263 = vunpack.c.l.b16 %v159
    %v264 = vunpack.c.h.b16 %v159
    %v265 = vunpack.c.l.b16 %v160
    %v266 = vunpack.c.h.b16 %v160
    %v267 = vunpack.c.l.b16 %v161
    %v268 = vunpack.c.h.b16 %v161
    %v269 = vunpack.c.l.b16 %v162
    %v270 = vunpack.c.h.b16 %v162
    %v271 = vpack.c.b16 %v209, %v207
    %v272 = vpack.c.b16 %v210, %v208
    %v273 = vpack.c.b16 %v213, %v211
    %v274 = vpack.c.b16 %v214, %v212
    %v275 = vpack.c.b16 %v217, %v215
    %v276 = vpack.c.b16 %v218, %v216
    %v277 = vpack.c.b16 %v221, %v219
    %v278 = vpack.c.b16 %v222, %v220
    %v279 = vpack.c.b16 %v225, %v223
    %v280 = vpack.c.b16 %v226, %v224
    %v281 = vpack.c.b16 %v229, %v227
    %v282 = vpack.c.b16 %v230, %v228
    %v283 = vpack.c.b16 %v233, %v231
    %v284 = vpack.c.b16 %v234, %v232
    %v285 = vpack.c.b16 %v237, %v235
    %v286 = vpack.c.b16 %v238, %v236
    %v287 = vpack.c.b16 %v241, %v239
    %v288 = vpack.c.b16 %v242, %v240
    %v289 = vpack.c.b16 %v245, %v243
    %v290 = vpack.c.b16 %v246, %v244
    %v291 = vpack.c.b16 %v249, %v247
    %v292 = vpack.c.b16 %v250, %v248
    %v293 = vpack.c.b16 %v253, %v251
    %v294 = vpack.c.b16 %v254, %v252
    %v295 = vpack.c.b16 %v257, %v255
    %v296 = vpack.c.b16 %v258, %v256
    %v297 = vpack.c.b16 %v261, %v259
    %v298 = vpack.c.b16 %v262, %v260
    %v299 = vpack.c.b16 %v265, %v263
    %v300 = vpack.c.b16 %v266, %v264
    %v301 = vpack.c.b16 %v269, %v267
    %v302 = vpack.c.b16 %v270, %v268
    %335 = vmatprep.subr.bf16.mxu0 %v286
    %336 = vmatpush1.bf16.msra.mxu0 %v285
    %337 = vmatprep.subr.bf16.mxu0 %v284
    %338 = vmatpush1.bf16.msra.mxu0 %v283
    %339 = vmatprep.subr.bf16.mxu0 %v282
    %340 = vmatpush1.bf16.msra.mxu0 %v281
    %341 = vmatprep.subr.bf16.mxu0 %v280
    %342 = vmatpush1.bf16.msra.mxu0 %v279
    %343 = vmatprep.subr.bf16.mxu0 %v278
    %344 = vmatpush1.bf16.msra.mxu0 %v277
    %345 = vmatprep.subr.bf16.mxu0 %v276
    %346 = vmatpush1.bf16.msra.mxu0 %v275
    %347 = vmatprep.subr.bf16.mxu0 %v274
    %348 = vmatpush1.bf16.msra.mxu0 %v273
    %349 = vmatprep.subr.bf16.mxu0 %v272
    %350 = vmatpush1.bf16.msra.mxu0 %v271
    %351 = vmatprep.subr.bf16.mxu0 %v302
    %352 = vmatpush2.bf16.msra.mxu0 %v301
    %353 = vmatprep.subr.bf16.mxu0 %v300
    %354 = vmatpush2.bf16.msra.mxu0 %v299
    %355 = vmatprep.subr.bf16.mxu0 %v298
    %356 = vmatpush2.bf16.msra.mxu0 %v297
    %357 = vmatprep.subr.bf16.mxu0 %v296
    %358 = vmatpush2.bf16.msra.mxu0 %v295
    %359 = vmatprep.subr.bf16.mxu0 %v294
    %360 = vmatpush2.bf16.msra.mxu0 %v293
    %361 = vmatprep.subr.bf16.mxu0 %v292
    %362 = vmatpush2.bf16.msra.mxu0 %v291
    %363 = vmatprep.subr.bf16.mxu0 %v290
    %364 = vmatpush2.bf16.msra.mxu0 %v289
    %365 = vmatprep.subr.bf16.mxu0 %v288
    %366 = vmatpush2.bf16.msra.mxu0 %v287
    %367 = vmatprep.mubr.bf16.mxu0 %v130
    %368 = vmatmul.mubr.bf16.gmra.mxu0 %v129
    %v369 = vpop.f32.mrf.mxu0
    %v370 = vadd.f32 %v168, %v369
    %v371 = vpop.f32.mrf.mxu0
    %v372 = vadd.f32 %v172, %v371
    %v373 = vpop.f32.mrf.mxu0
    %v374 = vpop.f32.mrf.mxu0
    %375 = vdwg.mxu0
    %v376 = vmax.f32 %v370, 0.0
    %v377 = vmax.f32 %v372, 0.0
    %v378 = vld [vmem:[%s5] sm:$0x3]
    %v380 = vlaneseq
    %v381 = vshrl.u32 %v380, 7
    %v382 = vsub.s32 0, %v381
    %v383 = vrot.slane %v378, %v382
    %v384 = vlaneseq
    %v385 = vshrl.u32 %v384, 7
    %v386 = vsub.s32 1, %v385
    %v387 = vrot.slane %v378, %v386
    %v390 = vmul.f32 %v376, %v383
    %v391 = vmul.f32 %v377, %v387
    %vm392 = vcmask 1041408
    %v393 = vsel %vm392, %v390, 0.0
    %v394 = vsel %vm392, %v391, 0.0
    %v395 = vadd.f32 %v393, %v394
    %396 = vadd.xlane.f32.xlu0 %v395
    %v397 = vpop.xlane.xlu0 %396
    %s398 = sld [smem:[#allocation2]]
    %v399 = vstv %s398
    %v400 = vadd.f32 %v397, %v399
    %v402 = vlaneseq
    %v403 = vand.u32 %v402, 127
    %v404 = vlaneseq
    %v405 = vshrl.u32 %v404, 7
    %v406 = vsub.s32 %v403, %v405
    %v407 = vrot.slane %v400, %v406
    %vm409 = vcmask 8192
    %410 = vst.msk [vmem:[#allocation8] sm:$0x1] %vm409, %v407
    // Predicated region
    $region38: #{tpu_custom_call.1} parent=1 // pred_check
      _
    $region39: #{tpu_custom_call.1} parent=1 // pred_check_branch
      %412 = sbr.rel (0) target = $region41
    $region40: #{tpu_custom_call.1} parent=1 // pred_region
      %s414 = ssub.s32 16, 16
      %415 = vsyncadd [#allocation5], %s414
      %s417 = sshll.u32 [#allocation8], 4
      %s418 = int_to_ptr.vmem [resolvable:$true] %s417
      %420 = dma.vmem_to_hbm [thread:$0]  %s418, 16, %s7, [#allocation5]
    $region41: #{tpu_custom_call.1} parent=1 // pred_fallthru
      _
    // Predicated region
    $region42: #{tpu_custom_call.1} parent=1 // pred_check
      _
    $region43: #{tpu_custom_call.1} parent=1 // pred_check_branch
      %422 = sbr.rel (0) target = $region45
    $region44: #{tpu_custom_call.1} parent=1 // pred_region
      %423 = dma.done [#allocation5], 16
    $region45: #{tpu_custom_call.1} parent=1 // pred_fallthru
      _
    %424 = vsyncpa [#allocation4], 1
    %425 = vsyncpa [#allocation7], 1
    %426 = vsyncpa [#allocation5], 1

</llo_original>
